<compile_context>
chip_gen: v6e
topology: v6e:2x2x1
jax: 0.10.0
libtpu: 0.0.40
codegen_flags: <defaults>
</compile_context>

<pallas_src>
import functools

import numpy as np
import jax
import jax.numpy as jnp
from jax.experimental import pallas as pl
from jax.experimental.pallas import tpu as pltpu


# ----------------------------- parameter setup (glue, init-time) -------------
def make_m_list(cls_num_list, max_m=0.5):
    m = 1.0 / np.sqrt(np.sqrt(np.asarray(cls_num_list, dtype=np.float64)))
    m = m * (max_m / np.max(m))
    return jnp.asarray(m, dtype=jnp.float32)


def calc_weights(cls_num_list, beta=0.9999):
    effective_num = 1.0 - np.power(beta, cls_num_list)
    per_cls_weights = (1.0 - beta) / np.array(effective_num)
    per_cls_weights = per_cls_weights / np.sum(per_cls_weights) * len(cls_num_list)
    return jnp.asarray(per_cls_weights, dtype=jnp.float32)


def _round_up(a, b):
    return ((a + b - 1) // b) * b


# ----------------------------- Pallas kernel ---------------------------------
def _ldam_kernel(x_ref, tgt_ref, m_ref, w_ref, out_ref, num_acc, den_acc,
                 *, s, n_valid, c_valid):
    i = pl.program_id(0)

    @pl.when(i == 0)
    def _init():
        num_acc[...] = jnp.zeros_like(num_acc)
        den_acc[...] = jnp.zeros_like(den_acc)

    x = x_ref[...].astype(jnp.float32)            # [TN, CP] logits (this tile)
    tgt = tgt_ref[...]                            # [TN, 1] int32 labels

    tn, cp = x.shape
    class_ids = jax.lax.broadcasted_iota(jnp.int32, (tn, cp), 1)
    index = class_ids == tgt                      # one-hot (bool), VPU compare
    valid_c = class_ids < c_valid                 # static class-padding mask

    # Margin gather as a masked subtract (pure VPU, no MXU round trip):
    #   x_m = x - m_list[target]   applied only at the target class.
    logits = s * (x - jnp.where(index, m_ref[...], jnp.float32(0.0)))
    # Exclude padded classes from the softmax.
    logits = jnp.where(valid_c, logits, jnp.float32(-1e30))

    # Numerically stable logsumexp over the class axis (single pass, C resident).
    row_max = jnp.max(logits, axis=-1, keepdims=True)
    shifted = logits - row_max
    sum_exp = jnp.sum(jnp.where(valid_c, jnp.exp(shifted), jnp.float32(0.0)),
                      axis=-1, keepdims=True)
    lse = jnp.log(sum_exp)

    # Target log-prob without materializing the full [TN, CP] log-softmax.
    tgt_shift = jnp.sum(jnp.where(index, shifted, jnp.float32(0.0)),
                        axis=-1, keepdims=True)   # [TN, 1]
    tgt_logp = tgt_shift - lse                    # [TN, 1]

    # Per-row class weight (gather via the same one-hot mask).
    w_tgt = jnp.sum(jnp.where(index, w_ref[...], jnp.float32(0.0)),
                    axis=-1, keepdims=True)       # [TN, 1]

    # Zero out padded batch rows so the global weighted mean stays exact.
    row_ids = i * tn + jax.lax.broadcasted_iota(jnp.int32, (tn, 1), 0)
    w_tgt = jnp.where(row_ids < n_valid, w_tgt, jnp.float32(0.0))

    # Global weighted-CE accumulators (numerator / denominator).
    num_acc[...] += jnp.sum(-w_tgt * tgt_logp, axis=0, keepdims=True)
    den_acc[...] += jnp.sum(w_tgt, axis=0, keepdims=True)

    @pl.when(i == pl.num_programs(0) - 1)
    def _finalize():
        out_ref[...] = num_acc[...] / den_acc[...]


# ----------------------------- wrapper ----------------------------------------
def ldam_loss(x, target, m_list, weight, s=30.0, tile_n=256):
    """LDAM loss; x: [N, C] logits (f32 or bf16), target: [N] int labels."""
    N, C = x.shape

    # Lane-dense class dim; batch padded to a whole number of tiles.
    c_pad = _round_up(C, 128)
    tile_n = _round_up(min(int(tile_n), _round_up(N, 8)), 8)
    n_pad = _round_up(N, tile_n)

    x_p = jnp.pad(x, ((0, n_pad - N), (0, c_pad - C)))
    tgt_p = jnp.pad(target.astype(jnp.int32), (0, n_pad - N)).reshape(n_pad, 1)
    m_row = jnp.pad(m_list.astype(jnp.float32), (0, c_pad - C)).reshape(1, c_pad)
    w_row = jnp.pad(weight.astype(jnp.float32), (0, c_pad - C)).reshape(1, c_pad)

    grid = (n_pad // tile_n,)
    kernel = functools.partial(_ldam_kernel, s=float(s), n_valid=N, c_valid=C)

    out = pl.pallas_call(
        kernel,
        out_shape=jax.ShapeDtypeStruct((1, 1), jnp.float32),
        grid_spec=pltpu.PrefetchScalarGridSpec(
            num_scalar_prefetch=0,
            grid=grid,
            in_specs=[
                pl.BlockSpec((tile_n, c_pad), lambda i: (i, 0)),   # x tile
                pl.BlockSpec((tile_n, 1), lambda i: (i, 0)),       # target tile
                pl.BlockSpec((1, c_pad), lambda i: (0, 0)),        # margins (row)
                pl.BlockSpec((1, c_pad), lambda i: (0, 0)),        # class weights
            ],
            out_specs=pl.BlockSpec((1, 1), lambda i: (0, 0)),      # scalar loss
            scratch_shapes=[
                pltpu.VMEM((1, 1), jnp.float32),                   # numerator acc
                pltpu.VMEM((1, 1), jnp.float32),                   # denominator acc
            ],
        ),
        compiler_params=pltpu.CompilerParams(
            dimension_semantics=("arbitrary",),                    # reduction axis
        ),
    )(x_p, tgt_p, m_row, w_row)
    return out[0, 0]


# ----------------------------- pure-JAX reference ------------------------------
def ldam_loss_ref(x, target, m_list, weight, s=30.0):
    N, C = x.shape
    onehot = jax.nn.one_hot(target, C, dtype=jnp.float32)
    batch_m = onehot @ m_list.reshape(C, 1)
    output = jnp.where(onehot.astype(bool), x.astype(jnp.float32) - batch_m,
                       x.astype(jnp.float32))
    logits = s * output
    logp = jax.nn.log_softmax(logits, axis=-1)
    tgt_logp = jnp.take_along_axis(logp, target[:, None], axis=-1)[:, 0]
    w_tgt = weight[target]
    return -jnp.sum(w_tgt * tgt_logp) / jnp.sum(w_tgt)


# ----------------------------- demo -------------------------------------------
if __name__ == "__main__":
    N, C = 20, 16  # batch, num_classes (exercises class padding + partial tile)
    key = jax.random.PRNGKey(0)
    kx, kt = jax.random.split(key)

    # Deterministic synthetic (imbalanced) class-count list.
    cls_num_list = [int(1000 // (i + 1)) for i in range(C)]
    m_list = make_m_list(cls_num_list, max_m=0.5)
    weight = calc_weights(cls_num_list, beta=0.9999)

    x = jax.random.normal(kx, (N, C), dtype=jnp.float32)
    target = jax.random.randint(kt, (N,), 0, C, dtype=jnp.int32)

    # Small tile so the demo runs a multi-step grid with a partial last tile.
    loss = ldam_loss(x, target, m_list, weight, s=30.0, tile_n=8)
    loss = jax.block_until_ready(loss)

    ref = ldam_loss_ref(x, target, m_list, weight, s=30.0)
    np.testing.assert_allclose(np.asarray(loss), np.asarray(ref), rtol=1e-4, atol=1e-4)

    print("KERNEL_OK")
</pallas_src>

<mosaic_0001>
module attributes {stable_mosaic.version = 11 : i64} {
  func.func @_ldam_kernel(%arg0: i32, %arg1: memref<8x128xf32, #tpu.memory_space<vmem>>, %arg2: memref<8x1xi32, #tpu.memory_space<vmem>>, %arg3: memref<1x128xf32, #tpu.memory_space<vmem>>, %arg4: memref<1x128xf32, #tpu.memory_space<vmem>>, %arg5: memref<1x1xf32, #tpu.memory_space<vmem>>, %arg6: memref<1x1xf32, #tpu.memory_space<vmem>>, %arg7: memref<1x1xf32, #tpu.memory_space<vmem>>) attributes {dimension_semantics = [#tpu.dimension_semantics<arbitrary>], iteration_bounds = array<i64: 3>, scalar_prefetch = 0 : i64, scratch_operands = 2 : i64, tpu.core_type = #tpu.core_type<tc>, window_params = [{transform_indices = @transform_0, window_bounds = array<i64: 8, 128>}, {transform_indices = @transform_1, window_bounds = array<i64: 8, 1>}, {pipeline_mode = #tpu.pipeline_mode<synchronous>, transform_indices = @transform_2, window_bounds = array<i64: 1, 128>}, {pipeline_mode = #tpu.pipeline_mode<synchronous>, transform_indices = @transform_3, window_bounds = array<i64: 1, 128>}, {pipeline_mode = #tpu.pipeline_mode<synchronous>, transform_indices = @transform_4, window_bounds = array<i64: 1, 1>}]} {
    %c0_i32 = arith.constant 0 : i32
    %0 = arith.cmpi eq, %arg0, %c0_i32 : i32
    %1 = arith.extui %0 : i1 to i32
    %c0_i32_0 = arith.constant 0 : i32
    %2 = arith.cmpi ne, %1, %c0_i32_0 : i32
    scf.if %2 {
      %cst_30 = arith.constant 0.000000e+00 : f32
      %66 = vector.broadcast %cst_30 : f32 to vector<1x1xf32>
      %c0_31 = arith.constant 0 : index
      %c0_32 = arith.constant 0 : index
      %67 = vector.load %arg6[%c0_31, %c0_32] : memref<1x1xf32, #tpu.memory_space<vmem>>, vector<1x1xf32>
      tpu.vector_store %arg6[%c0_31, %c0_32], %66 {strides = array<i32>} : memref<1x1xf32, #tpu.memory_space<vmem>>, vector<1x1xf32>,
      %cst_33 = arith.constant 0.000000e+00 : f32
      %68 = vector.broadcast %cst_33 : f32 to vector<1x1xf32>
      %c0_34 = arith.constant 0 : index
      %c0_35 = arith.constant 0 : index
      %69 = vector.load %arg7[%c0_34, %c0_35] : memref<1x1xf32, #tpu.memory_space<vmem>>, vector<1x1xf32>
      tpu.vector_store %arg7[%c0_34, %c0_35], %68 {strides = array<i32>} : memref<1x1xf32, #tpu.memory_space<vmem>>, vector<1x1xf32>,
    } else {
    }
    %c0 = arith.constant 0 : index
    %c0_1 = arith.constant 0 : index
    %3 = vector.load %arg1[%c0, %c0_1] : memref<8x128xf32, #tpu.memory_space<vmem>>, vector<8x128xf32>
    %c0_2 = arith.constant 0 : index
    %c0_3 = arith.constant 0 : index
    %4 = vector.load %arg2[%c0_2, %c0_3] : memref<8x1xi32, #tpu.memory_space<vmem>>, vector<8x1xi32>
    %5 = tpu.iota {dimensions = array<i32: 1>} : vector<8x128xi32>
    %6 = vector.broadcast %4 : vector<8x1xi32> to vector<8x128xi32>
    %7 = arith.cmpi eq, %5, %6 : vector<8x128xi32>
    %c16_i32 = arith.constant 16 : i32
    %8 = vector.broadcast %c16_i32 : i32 to vector<8x128xi32>
    %9 = arith.cmpi slt, %5, %8 : vector<8x128xi32>
    %c0_4 = arith.constant 0 : index
    %c0_5 = arith.constant 0 : index
    %10 = vector.load %arg3[%c0_4, %c0_5] : memref<1x128xf32, #tpu.memory_space<vmem>>, vector<1x128xf32>
    %cst = arith.constant 0.000000e+00 : f32
    %11 = vector.shape_cast %10 : vector<1x128xf32> to vector<1x128xf32>
    %12 = vector.broadcast %11 : vector<1x128xf32> to vector<8x128xf32>
    %13 = vector.broadcast %cst : f32 to vector<8x128xf32>
    %14 = arith.select %7, %12, %13 : vector<8x128xi1>, vector<8x128xf32>
    %15 = arith.subf %3, %14 : vector<8x128xf32>
    %cst_6 = arith.constant 3.000000e+01 : f32
    %16 = vector.broadcast %cst_6 : f32 to vector<8x128xf32>
    %17 = arith.mulf %16, %15 : vector<8x128xf32>
    %cst_7 = arith.constant -1.000000e+30 : f32
    %18 = vector.broadcast %cst_7 : f32 to vector<8x128xf32>
    %19 = arith.select %9, %17, %18 : vector<8x128xi1>, vector<8x128xf32>
    %cst_8 = arith.constant dense<0xFF800000> : vector<8xf32>
    %20 = vector.multi_reduction <maximumf>, %19, %cst_8 [1] : vector<8x128xf32> to vector<8xf32>
    %21 = vector.shape_cast %20 : vector<8xf32> to vector<8x1xf32>
    %22 = vector.broadcast %21 : vector<8x1xf32> to vector<8x128xf32>
    %23 = arith.subf %19, %22 : vector<8x128xf32>
    %24 = math.exp %23 : vector<8x128xf32>
    %cst_9 = arith.constant 0.000000e+00 : f32
    %25 = vector.broadcast %cst_9 : f32 to vector<8x128xf32>
    %26 = arith.select %9, %24, %25 : vector<8x128xi1>, vector<8x128xf32>
    %cst_10 = arith.constant dense<0.000000e+00> : vector<8xf32>
    %27 = vector.multi_reduction <add>, %26, %cst_10 [1] : vector<8x128xf32> to vector<8xf32>
    %28 = vector.shape_cast %27 : vector<8xf32> to vector<8x1xf32>
    %29 = math.log %28 : vector<8x1xf32>
    %cst_11 = arith.constant 0.000000e+00 : f32
    %30 = vector.broadcast %cst_11 : f32 to vector<8x128xf32>
    %31 = arith.select %7, %23, %30 : vector<8x128xi1>, vector<8x128xf32>
    %cst_12 = arith.constant dense<0.000000e+00> : vector<8xf32>
    %32 = vector.multi_reduction <add>, %31, %cst_12 [1] : vector<8x128xf32> to vector<8xf32>
    %33 = vector.shape_cast %32 : vector<8xf32> to vector<8x1xf32>
    %34 = arith.subf %33, %29 : vector<8x1xf32>
    %c0_13 = arith.constant 0 : index
    %c0_14 = arith.constant 0 : index
    %35 = vector.load %arg4[%c0_13, %c0_14] : memref<1x128xf32, #tpu.memory_space<vmem>>, vector<1x128xf32>
    %cst_15 = arith.constant 0.000000e+00 : f32
    %36 = vector.shape_cast %35 : vector<1x128xf32> to vector<1x128xf32>
    %37 = vector.broadcast %36 : vector<1x128xf32> to vector<8x128xf32>
    %38 = vector.broadcast %cst_15 : f32 to vector<8x128xf32>
    %39 = arith.select %7, %37, %38 : vector<8x128xi1>, vector<8x128xf32>
    %cst_16 = arith.constant dense<0.000000e+00> : vector<8xf32>
    %40 = vector.multi_reduction <add>, %39, %cst_16 [1] : vector<8x128xf32> to vector<8xf32>
    %41 = vector.shape_cast %40 : vector<8xf32> to vector<8x1xf32>
    %c8_i32 = arith.constant 8 : i32
    %42 = arith.muli %arg0, %c8_i32 : i32
    %43 = tpu.iota {dimensions = array<i32: 0>} : vector<8x1xi32>
    %44 = vector.broadcast %42 : i32 to vector<8x1xi32>
    %45 = arith.addi %44, %43 : vector<8x1xi32>
    %c20_i32 = arith.constant 20 : i32
    %46 = vector.broadcast %c20_i32 : i32 to vector<8x1xi32>
    %47 = arith.cmpi slt, %45, %46 : vector<8x1xi32>
    %cst_17 = arith.constant 0.000000e+00 : f32
    %48 = vector.broadcast %cst_17 : f32 to vector<8x1xf32>
    %49 = arith.select %47, %41, %48 : vector<8x1xi1>, vector<8x1xf32>
    %c0_18 = arith.constant 0 : index
    %c0_19 = arith.constant 0 : index
    %50 = vector.load %arg6[%c0_18, %c0_19] : memref<1x1xf32, #tpu.memory_space<vmem>>, vector<1x1xf32>
    %cst_20 = arith.constant 0.000000e+00 : f32
    %51 = vector.broadcast %cst_20 : f32 to vector<8x1xf32>
    %52 = arith.subf %51, %49 : vector<8x1xf32>
    %53 = arith.mulf %52, %34 : vector<8x1xf32>
    %cst_21 = arith.constant dense<0.000000e+00> : vector<1xf32>
    %54 = vector.multi_reduction <add>, %53, %cst_21 [0] : vector<8x1xf32> to vector<1xf32>
    %55 = vector.shape_cast %54 : vector<1xf32> to vector<1x1xf32>
    %56 = arith.addf %50, %55 : vector<1x1xf32>
    %c0_22 = arith.constant 0 : index
    %c0_23 = arith.constant 0 : index
    %57 = vector.load %arg6[%c0_22, %c0_23] : memref<1x1xf32, #tpu.memory_space<vmem>>, vector<1x1xf32>
    tpu.vector_store %arg6[%c0_22, %c0_23], %56 {strides = array<i32>} : memref<1x1xf32, #tpu.memory_space<vmem>>, vector<1x1xf32>,
    %c0_24 = arith.constant 0 : index
    %c0_25 = arith.constant 0 : index
    %58 = vector.load %arg7[%c0_24, %c0_25] : memref<1x1xf32, #tpu.memory_space<vmem>>, vector<1x1xf32>
    %cst_26 = arith.constant dense<0.000000e+00> : vector<1xf32>
    %59 = vector.multi_reduction <add>, %49, %cst_26 [0] : vector<8x1xf32> to vector<1xf32>
    %60 = vector.shape_cast %59 : vector<1xf32> to vector<1x1xf32>
    %61 = arith.addf %58, %60 : vector<1x1xf32>
    %c0_27 = arith.constant 0 : index
    %c0_28 = arith.constant 0 : index
    %62 = vector.load %arg7[%c0_27, %c0_28] : memref<1x1xf32, #tpu.memory_space<vmem>>, vector<1x1xf32>
    tpu.vector_store %arg7[%c0_27, %c0_28], %61 {strides = array<i32>} : memref<1x1xf32, #tpu.memory_space<vmem>>, vector<1x1xf32>,
    %c2_i32 = arith.constant 2 : i32
    %63 = arith.cmpi eq, %arg0, %c2_i32 : i32
    %64 = arith.extui %63 : i1 to i32
    %c0_i32_29 = arith.constant 0 : i32
    %65 = arith.cmpi ne, %64, %c0_i32_29 : i32
    scf.if %65 {
      %c0_30 = arith.constant 0 : index
      %c0_31 = arith.constant 0 : index
      %66 = vector.load %arg6[%c0_30, %c0_31] : memref<1x1xf32, #tpu.memory_space<vmem>>, vector<1x1xf32>
      %c0_32 = arith.constant 0 : index
      %c0_33 = arith.constant 0 : index
      %67 = vector.load %arg7[%c0_32, %c0_33] : memref<1x1xf32, #tpu.memory_space<vmem>>, vector<1x1xf32>
      %68 = arith.divf %66, %67 : vector<1x1xf32>
      %c0_34 = arith.constant 0 : index
      %c0_35 = arith.constant 0 : index
      %69 = vector.load %arg5[%c0_34, %c0_35] : memref<1x1xf32, #tpu.memory_space<vmem>>, vector<1x1xf32>
      tpu.vector_store %arg5[%c0_34, %c0_35], %68 {strides = array<i32>} : memref<1x1xf32, #tpu.memory_space<vmem>>, vector<1x1xf32>,
    } else {
    }
    return
  }
  func.func @transform_0(%arg0: i32) -> (i32, i32) {
    %c0_i32 = arith.constant 0 : i32
    %c0_i32_0 = arith.constant 0 : i32
    return %arg0, %c0_i32 : i32, i32
  }
  func.func @transform_1(%arg0: i32) -> (i32, i32) {
    %c0_i32 = arith.constant 0 : i32
    %c0_i32_0 = arith.constant 0 : i32
    return %arg0, %c0_i32 : i32, i32
  }
  func.func @transform_2(%arg0: i32) -> (i32, i32) {
    %c0_i32 = arith.constant 0 : i32
    %c0_i32_0 = arith.constant 0 : i32
    %c0_i32_1 = arith.constant 0 : i32
    return %c0_i32, %c0_i32_0 : i32, i32
  }
  func.func @transform_3(%arg0: i32) -> (i32, i32) {
    %c0_i32 = arith.constant 0 : i32
    %c0_i32_0 = arith.constant 0 : i32
    %c0_i32_1 = arith.constant 0 : i32
    return %c0_i32, %c0_i32_0 : i32, i32
  }
  func.func @transform_4(%arg0: i32) -> (i32, i32) {
    %c0_i32 = arith.constant 0 : i32
    %c0_i32_0 = arith.constant 0 : i32
    %c0_i32_1 = arith.constant 0 : i32
    return %c0_i32, %c0_i32_0 : i32, i32
  }
}

</mosaic_0001>

<llo_original>
// kernel: tpu_custom_call.1
$region0: #{tpu_custom_call.1}
  #allocation0 [shape = 'u32[]', space=smem, size = 0x4, offset = 0x4, fixed_abs, tag = 'smem constant byte address 0x4 - core index']
  #allocation1 [shape = 'u32[144,128]{1,0:T(1,128)}', space=vmem, size = 0x12000, scoped, tag = 'internal scratch']
  #allocation2 [shape = 'f32[1,1]{1,0:T(1,128)}', space=vmem, size = 0x200, scoped, tag = 'scratch operand']
  #allocation3 [shape = 'f32[1,1]{1,0:T(1,128)}', space=vmem, size = 0x200, scoped, tag = 'scratch operand']
  %s0 = inlined_call_operand.vmem [shape: f32[24,128], index: 0, kind: input, shape index: {}]
  %s1 = inlined_call_operand.vmem [shape: s32[24,1], index: 1, kind: input, shape index: {}]
  %s2 = inlined_call_operand.vmem [shape: f32[1,128], index: 2, kind: input, shape index: {}]
  %s3 = inlined_call_operand.vmem [shape: f32[1,128], index: 3, kind: input, shape index: {}]
  %s4 = inlined_call_operand.hbm [shape: f32[1,1], index: 4, kind: output, shape index: {}]
  %s5 = sld [smem:[#allocation0]]
  $region57: #{tpu_custom_call.1} parent=0
    _
  %s7 = ssub.s32 1, %s5
  %s8 = scalar_select 0, %s7, %s5
  $region1: #{tpu_custom_call.1} parent=0
    #allocation4 [shape = 'u8[512]{0}', space=vmem, size = 0x400, scoped, tag = 'output window, operand 0, single buffered']
    #allocation5 [shape = 's32[2]{0}', space=sflag, size = 0x8, scoped, tag = 'scoped memory for tpu_custom_call.1']
    %9 = vsyncpa [#allocation5], 0
    loop: start=0, step=1, limit=5
    $region2: #{tpu_custom_call.1} parent=1 // loop_pre_header
      _
    $region3: #{tpu_custom_call.1} parent=1 // loop_header
      %s11 = sphi 0, %s15
      %p12 = scmp.ge.s32.totalorder %s11, 5
      %s21 = sphi 0, %s23
      %s24 = sphi 0, %s21
      %s25 = sphi 0, %s24
      %s41 = sphi 0, %s25
      %s47 = sphi 0, %s49
      %s50 = sphi 0, %s47
      %s51 = sphi 0, %s50
      %s67 = sphi 0, %s51
      %s71 = sphi 0, %s71
      %s73 = sphi 0, %s71
      %s74 = sphi 0, %s73
      %s88 = sphi 0, %s74
      %s92 = sphi 0, %s92
      %s94 = sphi 0, %s92
      %s95 = sphi 0, %s94
      %s109 = sphi 0, %s95
      %s113 = sphi 0, %s113
      %s115 = sphi 0, %s113
      %s116 = sphi 0, %s115
      %s130 = sphi 0, %s116
    $region4: #{tpu_custom_call.1} parent=1 // loop_header_branch
      %14 = sbr.rel (%p12) target = $region8
    $region5: #{tpu_custom_call.1} parent=1 // loop_body
      %s16 = ssub.s32 %s11, 1
      %s17 = ssub.s32 %s11, 2
      %s18 = sadd.s32 %s11, 1
      %s19 = ssub.s32 %s11, %s18
      %p20 = scmp.eq.s32.totalorder %s19, 0
      %s22 = sadd.s32 %s21, 1
      %s23 = scalar_select %p20, %s21, %s22
      %p26 = pneg %p20
      %p27 = scmp.eq.s32.totalorder %s11, 2
      %p28 = por %p26, %p27
      %p29 = scmp.ne.s32.totalorder %s21, %s24
      %p30 = scmp.eq.s32.totalorder %s11, 0
      %p31 = por %p29, %p30
      %p32 = scmp.ne.s32.totalorder %s21, %s24
      %p33 = scmp.eq.s32.totalorder %s16, 2
      %p34 = por %p32, %p33
      %p35 = scmp.ne.s32.totalorder %s24, %s25
      %p36 = scmp.eq.s32.totalorder %s16, 0
      %p37 = por %p35, %p36
      %p38 = scmp.ne.s32.totalorder %s24, %s25
      %p39 = scmp.eq.s32.totalorder %s17, 2
      %p40 = por %p38, %p39
      %p42 = scmp.ne.s32.totalorder %s25, %s41
      %p43 = scmp.eq.s32.totalorder %s17, 0
      %p44 = por %p42, %p43
      %s45 = ssub.s32 %s11, %s18
      %p46 = scmp.eq.s32.totalorder %s45, 0
      %s48 = sadd.s32 %s47, 1
      %s49 = scalar_select %p46, %s47, %s48
      %p52 = pneg %p46
      %p53 = scmp.eq.s32.totalorder %s11, 2
      %p54 = por %p52, %p53
      %p55 = scmp.ne.s32.totalorder %s47, %s50
      %p56 = scmp.eq.s32.totalorder %s11, 0
      %p57 = por %p55, %p56
      %p58 = scmp.ne.s32.totalorder %s47, %s50
      %p59 = scmp.eq.s32.totalorder %s16, 2
      %p60 = por %p58, %p59
      %p61 = scmp.ne.s32.totalorder %s50, %s51
      %p62 = scmp.eq.s32.totalorder %s16, 0
      %p63 = por %p61, %p62
      %p64 = scmp.ne.s32.totalorder %s50, %s51
      %p65 = scmp.eq.s32.totalorder %s17, 2
      %p66 = por %p64, %p65
      %p68 = scmp.ne.s32.totalorder %s51, %s67
      %p69 = scmp.eq.s32.totalorder %s17, 0
      %p70 = por %p68, %p69
      %s72 = sadd.s32 %s71, 1
      %p75 = scmp.eq.s32.totalorder %s11, 2
      %p76 = scmp.ne.s32.totalorder %s71, %s73
      %p77 = scmp.eq.s32.totalorder %s11, 0
      %p78 = por %p76, %p77
      %p79 = scmp.ne.s32.totalorder %s71, %s73
      %p80 = scmp.eq.s32.totalorder %s16, 2
      %p81 = por %p79, %p80
      %p82 = scmp.ne.s32.totalorder %s73, %s74
      %p83 = scmp.eq.s32.totalorder %s16, 0
      %p84 = por %p82, %p83
      %p85 = scmp.ne.s32.totalorder %s73, %s74
      %p86 = scmp.eq.s32.totalorder %s17, 2
      %p87 = por %p85, %p86
      %p89 = scmp.ne.s32.totalorder %s74, %s88
      %p90 = scmp.eq.s32.totalorder %s17, 0
      %p91 = por %p89, %p90
      %s93 = sadd.s32 %s92, 1
      %p96 = scmp.eq.s32.totalorder %s11, 2
      %p97 = scmp.ne.s32.totalorder %s92, %s94
      %p98 = scmp.eq.s32.totalorder %s11, 0
      %p99 = por %p97, %p98
      %p100 = scmp.ne.s32.totalorder %s92, %s94
      %p101 = scmp.eq.s32.totalorder %s16, 2
      %p102 = por %p100, %p101
      %p103 = scmp.ne.s32.totalorder %s94, %s95
      %p104 = scmp.eq.s32.totalorder %s16, 0
      %p105 = por %p103, %p104
      %p106 = scmp.ne.s32.totalorder %s94, %s95
      %p107 = scmp.eq.s32.totalorder %s17, 2
      %p108 = por %p106, %p107
      %p110 = scmp.ne.s32.totalorder %s95, %s109
      %p111 = scmp.eq.s32.totalorder %s17, 0
      %p112 = por %p110, %p111
      %s114 = sadd.s32 %s113, 1
      %p117 = scmp.eq.s32.totalorder %s11, 2
      %p118 = scmp.ne.s32.totalorder %s113, %s115
      %p119 = scmp.eq.s32.totalorder %s11, 0
      %p120 = por %p118, %p119
      %p121 = scmp.ne.s32.totalorder %s113, %s115
      %p122 = scmp.eq.s32.totalorder %s16, 2
      %p123 = por %p121, %p122
      %p124 = scmp.ne.s32.totalorder %s115, %s116
      %p125 = scmp.eq.s32.totalorder %s16, 0
      %p126 = por %p124, %p125
      %p127 = scmp.ne.s32.totalorder %s115, %s116
      %p128 = scmp.eq.s32.totalorder %s17, 2
      %p129 = por %p127, %p128
      %p131 = scmp.ne.s32.totalorder %s116, %s130
      %p132 = scmp.eq.s32.totalorder %s17, 0
      %p133 = por %p131, %p132
      %p134 = scmp.le.s32.totalorder 1, %s11
      %p135 = scmp.lt.s32.totalorder %s11, 4
      %p136 = pnand %p134, %p135
      %p137 = pneg %p136
      // Predicated region
      $region9: #{tpu_custom_call.1} parent=5 // pred_check
        _
      $region10: #{tpu_custom_call.1} parent=5 // pred_check_branch
        %139 = sbr.rel (%p136) target = $region12
      $region11: #{tpu_custom_call.1} parent=5 // pred_region
        %s140 = ssub.s32 %s11, 1
        // Predicated region
        $region13: #{tpu_custom_call.1} parent=11 // pred_check
          %p141 = pneg %p84
        $region14: #{tpu_custom_call.1} parent=11 // pred_check_branch
          %143 = sbr.rel (%p141) target = $region16
        $region15: #{tpu_custom_call.1} parent=11 // pred_region
          _
        $region16: #{tpu_custom_call.1} parent=11 // pred_fallthru
          _
        // Predicated region
        $region17: #{tpu_custom_call.1} parent=11 // pred_check
          %p144 = pneg %p105
        $region18: #{tpu_custom_call.1} parent=11 // pred_check_branch
          %146 = sbr.rel (%p144) target = $region20
        $region19: #{tpu_custom_call.1} parent=11 // pred_region
          _
        $region20: #{tpu_custom_call.1} parent=11 // pred_fallthru
          _
      $region12: #{tpu_custom_call.1} parent=5 // pred_fallthru
        _
      %p147 = scmp.lt.s32.totalorder %s11, 3
      // Predicated region
      $region21: #{tpu_custom_call.1} parent=5 // pred_check
        %p148 = pneg %p147
      $region22: #{tpu_custom_call.1} parent=5 // pred_check_branch
        %150 = sbr.rel (%p148) target = $region24
      $region23: #{tpu_custom_call.1} parent=5 // pred_region
        // Predicated region
        $region25: #{tpu_custom_call.1} parent=23 // pred_check
          %p151 = pneg %p31
        $region26: #{tpu_custom_call.1} parent=23 // pred_check_branch
          %153 = sbr.rel (%p151) target = $region28
        $region27: #{tpu_custom_call.1} parent=23 // pred_region
          %p154 = scmp.lt.s32.totalorder %s11, 2
          %s155 = scalar_select %p154, %s11, 2
          %s156 = smul.addr %s155, 8
          %s157 = scalar_lea.vmem %s0, %s156
        $region28: #{tpu_custom_call.1} parent=23 // pred_fallthru
          _
        // Predicated region
        $region29: #{tpu_custom_call.1} parent=23 // pred_check
          %p158 = pneg %p57
        $region30: #{tpu_custom_call.1} parent=23 // pred_check_branch
          %160 = sbr.rel (%p158) target = $region32
        $region31: #{tpu_custom_call.1} parent=23 // pred_region
          %p161 = scmp.lt.s32.totalorder %s11, 2
          %s162 = scalar_select %p161, %s11, 2
          %s163 = smul.addr %s162, 8
          %s164 = scalar_lea.vmem %s1, %s163
        $region32: #{tpu_custom_call.1} parent=23 // pred_fallthru
          _
      $region24: #{tpu_custom_call.1} parent=5 // pred_fallthru
        _
      %p165 = scmp.le.s32.totalorder 1, %s11
      %p166 = scmp.lt.s32.totalorder %s11, 4
      %p167 = pnand %p165, %p166
      %p168 = pneg %p167
      // Predicated region
      $region33: #{tpu_custom_call.1} parent=5 // pred_check
        _
      $region34: #{tpu_custom_call.1} parent=5 // pred_check_branch
        %170 = sbr.rel (%p167) target = $region36
      $region35: #{tpu_custom_call.1} parent=5 // pred_region
        %s171 = ssub.s32 %s11, 1
        %p172 = scmp.lt.s32.totalorder %s16, 2
        %s173 = scalar_select %p172, %s16, 2
        %s174 = smul.addr %s173, 8
        %s175 = scalar_lea.vmem %s0, %s174
        %p176 = pneg %p37
        %p177 = pneg %p34
        %p178 = scmp.lt.s32.totalorder %s16, 2
        %s179 = scalar_select %p178, %s16, 2
        %s180 = smul.addr %s179, 8
        %s181 = scalar_lea.vmem %s1, %s180
        %p182 = pneg %p63
        %p183 = pneg %p60
        %p184 = pneg %p84
        %p185 = pneg %p81
        %p186 = pneg %p105
        %p187 = pneg %p102
        %p188 = pneg %p126
        %p189 = pneg %p123
        %p190 = scmp.lt.s32.totalorder %s16, 2
        %s191 = scalar_select %p190, %s16, 2
        %s192 = smul.addr %s191, 8
        %s193 = scalar_lea.vmem %s0, %s192
        %p194 = scmp.lt.s32.totalorder %s16, 2
        %s195 = scalar_select %p194, %s16, 2
        %s196 = smul.addr %s195, 8
        %s197 = scalar_lea.vmem %s1, %s196
        %p198 = scmp.eq.s32.totalorder %s16, 0
        // Predicated region
        $region37: #{tpu_custom_call.1} parent=35 // pred_check
          %p199 = pneg %p198
        $region38: #{tpu_custom_call.1} parent=35 // pred_check_branch
          %201 = sbr.rel (%p199) target = $region40
        $region39: #{tpu_custom_call.1} parent=35 // pred_region
          %vm202 = vcmask 0
          %203 = vst.msk [vmem:[#allocation2] sm:$0x1] %vm202, 0.0
          %204 = vst.msk [vmem:[#allocation3] sm:$0x1] %vm202, 0.0
        $region40: #{tpu_custom_call.1} parent=35 // pred_fallthru
          _
        %v205 = vld [vmem:[%s193] sm:$0xff]
        %v206 = vld [vmem:[%s197] sm:$0xff]
        %v207 = vlaneseq
        %v208 = vand.u32 %v207, 127
        %209 = vset.pattern.permute.xlu0 0
        %210 = vperm.xlu0 %209, %v206
        %v211 = vpop.permute.xlu0 %210
        %vm212 = vcmp.eq.s32.totalorder %v208, %v211
        %vm213 = vcmp.lt.s32.totalorder %v208, 16
        %v214 = vld [vmem:[%s2] sm:$0x1]
        %v216 = vlaneseq
        %v217 = vshrl.u32 %v216, 7
        %v218 = vsub.s32 0, %v217
        %v219 = vrot.slane %v214, %v218
        %v221 = vsel %vm212, %v219, 0.0
        %v222 = vsub.f32 %v205, %v221
        %v223 = vmul.f32 %v222, 30.0
        %v224 = vsel %vm213, %v223, -1e+30
        %225 = vmax.xlane.f32.xlu0 %v224
        %v226 = vpop.xlane.xlu0 %225
        %v227 = vsub.f32 %v224, %v226
        %v228 = vmul.f32 %v227, 1.442695
        %v229 = vpow.pop %v228
        %v230 = vsel %vm213, %v229, 0.0
        %231 = vadd.xlane.f32.xlu0 %v230
        %v232 = vpop.xlane.xlu0 %231
        %v233 = vlog2.pop %v232
        %v234 = vmul.f32 %v233, 0.6931472
        %v235 = vsel %vm212, %v227, 0.0
        %236 = vadd.xlane.f32.xlu0 %v235
        %v237 = vpop.xlane.xlu0 %236
        %v238 = vsub.f32 %v237, %v234
        %v239 = vld [vmem:[%s3] sm:$0x1]
        %v241 = vlaneseq
        %v242 = vshrl.u32 %v241, 7
        %v243 = vsub.s32 0, %v242
        %v244 = vrot.slane %v239, %v243
        %v246 = vsel %vm212, %v244, 0.0
        %247 = vadd.xlane.f32.xlu0 %v246
        %v248 = vpop.xlane.xlu0 %247
        %s249 = smul.u32 %s16, 8
        %v250 = vlaneseq
        %v251 = vshrl.u32 %v250, 7
        %v252 = vstv %s249
        %v253 = vadd.s32 %v252, %v251
        %vm254 = vcmp.lt.s32.totalorder %v253, 20
        %v255 = vsel %vm254, %v248, 0.0
        %v256 = vld [vmem:[#allocation2] sm:$0x1]
        %v257 = vsub.f32 0.0, %v255
        %v258 = vmul.f32 %v257, %v238
        %v259 = vrot.slane %v258, 4
        %v260 = vadd.f32 %v258, %v259
        %v261 = vrot.slane %v260, 2
        %v262 = vadd.f32 %v260, %v261
        %v263 = vrot.slane %v262, 1
        %v264 = vadd.f32 %v262, %v263
        %v265 = vadd.f32 %v256, %v264
        %vm266 = vcmask 0
        %267 = vst.msk [vmem:[#allocation2] sm:$0x1] %vm266, %v265
        %v268 = vld [vmem:[#allocation3] sm:$0x1]
        %v269 = vrot.slane %v255, 4
        %v270 = vadd.f32 %v255, %v269
        %v271 = vrot.slane %v270, 2
        %v272 = vadd.f32 %v270, %v271
        %v273 = vrot.slane %v272, 1
        %v274 = vadd.f32 %v272, %v273
        %v275 = vadd.f32 %v268, %v274
        %276 = vst.msk [vmem:[#allocation3] sm:$0x1] %vm266, %v275
        %p277 = scmp.eq.s32.totalorder %s16, 2
        // Predicated region
        $region41: #{tpu_custom_call.1} parent=35 // pred_check
          %p278 = pneg %p277
        $region42: #{tpu_custom_call.1} parent=35 // pred_check_branch
          %280 = sbr.rel (%p278) target = $region44
        $region43: #{tpu_custom_call.1} parent=35 // pred_region
          %v281 = vld [vmem:[#allocation2] sm:$0x1]
          %v282 = vld [vmem:[#allocation3] sm:$0x1]
          %v283 = vrcp.pop %v282
          %v284 = vmul.f32 %v281, %v283
          %285 = vst.msk [vmem:[#allocation4] sm:$0x1] %vm266, %v284
        $region44: #{tpu_custom_call.1} parent=35 // pred_fallthru
          _
        // Predicated region
        $region45: #{tpu_custom_call.1} parent=35 // pred_check
          %p286 = pneg %p123
        $region46: #{tpu_custom_call.1} parent=35 // pred_check_branch
          %288 = sbr.rel (%p286) target = $region48
        $region47: #{tpu_custom_call.1} parent=35 // pred_region
          %s290 = ssub.s32 16, 16
          %291 = vsyncadd [#allocation5], %s290
          %s293 = sshll.u32 [#allocation4], 4
          %s294 = int_to_ptr.vmem [resolvable:$true] %s293
          %296 = dma.vmem_to_hbm [thread:$0]  %s294, 16, %s4, [#allocation5]
        $region48: #{tpu_custom_call.1} parent=35 // pred_fallthru
          _
        // Predicated region
        $region49: #{tpu_custom_call.1} parent=35 // pred_check
          %p297 = pneg %p123
        $region50: #{tpu_custom_call.1} parent=35 // pred_check_branch
          %299 = sbr.rel (%p297) target = $region52
        $region51: #{tpu_custom_call.1} parent=35 // pred_region
          %300 = dma.done [#allocation5], 16
        $region52: #{tpu_custom_call.1} parent=35 // pred_fallthru
          _
      $region36: #{tpu_custom_call.1} parent=5 // pred_fallthru
        _
      %p301 = scmp.le.s32.totalorder 2, %s11
      // Predicated region
      $region53: #{tpu_custom_call.1} parent=5 // pred_check
        %p302 = pneg %p301
      $region54: #{tpu_custom_call.1} parent=5 // pred_check_branch
        %304 = sbr.rel (%p302) target = $region56
      $region55: #{tpu_custom_call.1} parent=5 // pred_region
        %s305 = ssub.s32 %s11, 2
      $region56: #{tpu_custom_call.1} parent=5 // pred_fallthru
        _
    $region6: #{tpu_custom_call.1} parent=1 // loop_footer
      %s15 = sadd.s32 1, %s11
    $region7: #{tpu_custom_call.1} parent=1 // loop_footer_branch
      %10 = sbr.rel target = $region3
    $region8: #{tpu_custom_call.1} parent=1 // loop_exit
      _
    %306 = vsyncpa [#allocation5], 1
    %s307 = scalar_lea.sflag [#allocation5], 1
    %308 = vsyncpa %s307, 1

</llo_original>
